<compile_context>
chip_gen: v6e
topology: v6e:2x2x1
jax: 0.10.0
libtpu: 0.0.40
codegen_flags: <defaults>
</compile_context>

<pallas_src>
import jax
import jax.numpy as jnp
from jax.experimental import pallas as pl
from jax.experimental.pallas import tpu as pltpu


_ROW_TILE_CAP = 512  # multiple of 128; two full passes of a 2x256 MXU


def visual_pooler_kernel(x_ref, w_ref, b_ref, o_ref):
    """One (row-tile, col-tile) output block of tanh(x @ W + b).

    x_ref: [tb, H]   first-token rows (compute dtype, e.g. bf16)
    w_ref: [H, tn]   dense weight slice, [in, out] layout (compute dtype)
    b_ref: [1, tn]   dense bias slice (f32)
    o_ref: [tb, tn]  pooled output block (activation dtype)
    """
    acc = jnp.dot(x_ref[...], w_ref[...], preferred_element_type=jnp.float32)
    acc = acc + b_ref[...].astype(jnp.float32)     # bias add in f32 (VPU)
    o_ref[...] = jnp.tanh(acc).astype(o_ref.dtype)  # tanh -> EUP slot


def _itemsize(dtype):
    return jnp.zeros((), dtype).dtype.itemsize


def _is_v7():
    try:
        return "v7" in jax.devices()[0].device_kind.lower()
    except Exception:
        return False


def _tensorcores_per_chip():
    # v5e / v6e: 1 TensorCore per chip; v7x: 2.
    return 2 if _is_v7() else 1


def _pick_row_tile(batch):
    """Single full-size tile for small/medium B; only tile when B > cap."""
    if batch <= _ROW_TILE_CAP:
        return batch, 1
    return _ROW_TILE_CAP, pl.cdiv(batch, _ROW_TILE_CAP)


def _pick_col_split(hidden, w_itemsize, min_split, weight_budget_bytes):
    """Smallest N-split (tn a multiple of 128) that (a) gives each TensorCore
    a disjoint weight slice when min_split > 1 and (b) keeps a weight block
    within the VMEM budget.  Returns 1 for tiny/ragged H (keep resident)."""
    if hidden % 128 != 0:
        return 1
    lanes = hidden // 128
    splits = [s for s in range(1, lanes + 1) if lanes % s == 0]
    for s in splits:
        if s >= min_split and hidden * (hidden // s) * w_itemsize <= weight_budget_bytes:
            return s
    return splits[-1]


def visual_pooler(hidden_states, w, b, *, compute_dtype=jnp.bfloat16):
    """VisualPooler forward: tanh(hidden_states[:, 0] @ w + b).

    hidden_states: [B, S, H]
    w:             [H, H]   dense weight in [in, out] layout (PyTorch weight.T)
    b:             [H]
    returns:       [B, H]   in hidden_states.dtype
    """
    B, S, H = hidden_states.shape
    out_dtype = hidden_states.dtype

    # First-token select: layout plumbing over only B*H elements (see TODO above).
    x = hidden_states[:, 0, :].astype(compute_dtype)
    wc = w.astype(compute_dtype)
    b2d = b.astype(jnp.float32).reshape(1, H)

    x_item = _itemsize(compute_dtype)
    w_item = _itemsize(compute_dtype)
    out_item = _itemsize(out_dtype)

    tb, nb_b = _pick_row_tile(B)

    n_cores = _tensorcores_per_chip()
    weight_budget = 16 << 20  # per-block weight budget; safe on every generation
    nb_n = _pick_col_split(H, w_item, n_cores, weight_budget)
    tn = H // nb_n

    # Grid-invariant weight/bias blocks: single-buffer them (double-buffering a
    # constant block only doubles its VMEM footprint).
    if nb_n == 1:
        w_spec = pl.BlockSpec((H, tn), lambda j, i: (0, j), pipeline_mode=pl.Buffered(1))
        b_spec = pl.BlockSpec((1, tn), lambda j, i: (0, j), pipeline_mode=pl.Buffered(1))
        w_bufs = 1
    else:
        w_spec = pl.BlockSpec((H, tn), lambda j, i: (0, j))
        b_spec = pl.BlockSpec((1, tn), lambda j, i: (0, j))
        w_bufs = 2

    # VMEM budget: weight buffers + double-buffered x / out tiles + bias.
    needed = (w_bufs * H * tn * w_item
              + 2 * tb * H * x_item
              + 2 * tb * tn * out_item
              + w_bufs * tn * 4)
    phys_cap = (48 << 20) if _is_v7() else (100 << 20)  # v7x: 64 MiB physical
    vmem_limit = int(min(phys_cap, max(32 << 20, needed * 5 // 4)))

    cost = pl.CostEstimate(
        flops=2 * B * H * H,
        transcendentals=B * H,
        bytes_accessed=(nb_n * B * H * x_item   # x re-read once per column block
                        + H * H * w_item        # weight read once total
                        + H * 4                 # bias (f32)
                        + B * H * out_item),
    )

    # Grid: N (weight columns) outermost so megacore sharding gives each core a
    # disjoint weight slice; batch innermost so the weight block stays resident
    # across batch tiles (its index does not change on the inner axis).
    grid = (nb_n, nb_b)

    return pl.pallas_call(
        visual_pooler_kernel,
        out_shape=jax.ShapeDtypeStruct((B, H), out_dtype),
        grid_spec=pl.GridSpec(
            grid=grid,
            in_specs=[
                pl.BlockSpec((tb, H), lambda j, i: (i, 0)),  # first-token rows
                w_spec,                                      # weight [H, tn]
                b_spec,                                      # bias   [1, tn]
            ],
            out_specs=pl.BlockSpec((tb, tn), lambda j, i: (i, j)),
        ),
        compiler_params=pltpu.CompilerParams(
            dimension_semantics=("parallel", "parallel"),
            vmem_limit_bytes=vmem_limit,
        ),
        cost_estimate=cost,
    )(x, wc, b2d)


def visual_pooler_ref(hidden_states, w, b):
    return jnp.tanh(hidden_states[:, 0, :] @ w + b)


if __name__ == "__main__":
    # VisualPooler config: hidden_size=32; inputs: batch=2, seq=8.
    B, S, H = 2, 8, 32

    key = jax.random.PRNGKey(0)
    k1, k2, k3 = jax.random.split(key, 3)

    hidden_states = jax.random.normal(k1, (B, S, H), dtype=jnp.float32)

    # Deterministic synthetic parameters (not a checkpoint load).
    # PyTorch nn.Linear stores weight as [out, in]; the kernel consumes the
    # transpose [in, out] so the MXU computes x @ W directly.
    w_torch = jax.random.normal(k2, (H, H), dtype=jnp.float32) * 0.02
    b = jax.random.normal(k3, (H,), dtype=jnp.float32) * 0.02
    w = w_torch.T

    ref = visual_pooler_ref(hidden_states, w, b)

    # f32 compute path: tight check of the kernel structure.
    out_f32 = jax.block_until_ready(
        visual_pooler(hidden_states, w, b, compute_dtype=jnp.float32))
    assert out_f32.shape == (B, H)
    assert jnp.allclose(out_f32, ref, atol=1e-5, rtol=1e-5), "f32 mismatch vs reference"

    # bf16 matmul path (production default): relaxed tolerance.
    out_bf16 = jax.block_until_ready(visual_pooler(hidden_states, w, b))
    assert out_bf16.shape == (B, H)
    assert jnp.allclose(out_bf16, ref, atol=2e-2, rtol=2e-2), "bf16 mismatch vs reference"

    print("KERNEL_OK")
</pallas_src>

<mosaic_0001>
module attributes {stable_mosaic.version = 11 : i64} {
  func.func @visual_pooler_kernel(%arg0: i32, %arg1: i32, %arg2: memref<2x32xf32, #tpu.memory_space<vmem>>, %arg3: memref<32x32xf32, #tpu.memory_space<vmem>>, %arg4: memref<1x32xf32, #tpu.memory_space<vmem>>, %arg5: memref<2x32xf32, #tpu.memory_space<vmem>>) attributes {dimension_semantics = [#tpu.dimension_semantics<parallel>, #tpu.dimension_semantics<parallel>], iteration_bounds = array<i64: 1, 1>, scalar_prefetch = 0 : i64, scratch_operands = 0 : i64, tpu.core_type = #tpu.core_type<tc>, window_params = [{transform_indices = @transform_0, window_bounds = array<i64: 2, 32>}, {pipeline_mode = #tpu.pipeline_mode<synchronous>, transform_indices = @transform_1, window_bounds = array<i64: 32, 32>}, {pipeline_mode = #tpu.pipeline_mode<synchronous>, transform_indices = @transform_2, window_bounds = array<i64: 1, 32>}, {transform_indices = @transform_3, window_bounds = array<i64: 2, 32>}]} {
    %c0 = arith.constant 0 : index
    %c0_0 = arith.constant 0 : index
    %0 = vector.load %arg2[%c0, %c0_0] : memref<2x32xf32, #tpu.memory_space<vmem>>, vector<2x32xf32>
    %c0_1 = arith.constant 0 : index
    %c0_2 = arith.constant 0 : index
    %1 = vector.load %arg3[%c0_1, %c0_2] : memref<32x32xf32, #tpu.memory_space<vmem>>, vector<32x32xf32>
    %cst = arith.constant dense<0.000000e+00> : vector<2x32xf32>
    %2 = tpu.matmul %0, %1, %cst {dimension_numbers = #tpu.dot_dimension_numbers<[1], [0], [0], [1], [0, 0, 1, 1], [], []>} : vector<2x32xf32>, vector<32x32xf32>, vector<2x32xf32> -> vector<2x32xf32>
    %c0_3 = arith.constant 0 : index
    %c0_4 = arith.constant 0 : index
    %3 = vector.load %arg4[%c0_3, %c0_4] : memref<1x32xf32, #tpu.memory_space<vmem>>, vector<1x32xf32>
    %4 = vector.broadcast %3 : vector<1x32xf32> to vector<2x32xf32>
    %5 = arith.addf %2, %4 : vector<2x32xf32>
    %6 = math.tanh %5 : vector<2x32xf32>
    %c0_5 = arith.constant 0 : index
    %c0_6 = arith.constant 0 : index
    %7 = vector.load %arg5[%c0_5, %c0_6] : memref<2x32xf32, #tpu.memory_space<vmem>>, vector<2x32xf32>
    tpu.vector_store %arg5[%c0_5, %c0_6], %6 {strides = array<i32>} : memref<2x32xf32, #tpu.memory_space<vmem>>, vector<2x32xf32>,
    return
  }
  func.func @transform_0(%arg0: i32, %arg1: i32) -> (i32, i32) {
    %c0_i32 = arith.constant 0 : i32
    %c0_i32_0 = arith.constant 0 : i32
    return %arg1, %c0_i32 : i32, i32
  }
  func.func @transform_1(%arg0: i32, %arg1: i32) -> (i32, i32) {
    %c0_i32 = arith.constant 0 : i32
    %c0_i32_0 = arith.constant 0 : i32
    return %c0_i32, %arg0 : i32, i32
  }
  func.func @transform_2(%arg0: i32, %arg1: i32) -> (i32, i32) {
    %c0_i32 = arith.constant 0 : i32
    %c0_i32_0 = arith.constant 0 : i32
    return %c0_i32, %arg0 : i32, i32
  }
  func.func @transform_3(%arg0: i32, %arg1: i32) -> (i32, i32) {
    %c0_i32 = arith.constant 0 : i32
    return %arg1, %arg0 : i32, i32
  }
}

</mosaic_0001>

<llo_original>
// kernel: tpu_custom_call.1
$region0: #{tpu_custom_call.1}
  #allocation0 [shape = 'u32[]', space=smem, size = 0x4, offset = 0x4, fixed_abs, tag = 'smem constant byte address 0x4 - core index']
  #allocation1 [shape = 'u32[144,128]{1,0:T(1,128)}', space=vmem, size = 0x12000, scoped, tag = 'internal scratch']
  %s0 = inlined_call_operand.hbm [shape: f32[2,32], index: 0, kind: input, shape index: {}]
  %s1 = inlined_call_operand.hbm [shape: f32[32,32], index: 1, kind: input, shape index: {}]
  %s2 = inlined_call_operand.vmem [shape: f32[1,32], index: 2, kind: input, shape index: {}]
  %s3 = inlined_call_operand.hbm [shape: f32[2,32], index: 3, kind: output, shape index: {}]
  %s4 = sld [smem:[#allocation0]]
  $region30: #{tpu_custom_call.1} parent=0
    _
  %s6 = ssub.s32 1, %s4
  %s7 = scalar_select 0, %s6, %s4
  $region1: #{tpu_custom_call.1} parent=0
    #allocation2 [shape = 'u8[1024]{0}', space=vmem, size = 0x400, scoped, tag = 'input window, operand 0, single buffered']
    #allocation3 [shape = 's32[1]{0}', space=sflag, size = 0x4, scoped, tag = 'scoped memory for tpu_custom_call.1']
    #allocation4 [shape = 's32[1]{0}', space=sflag, size = 0x4, scoped, tag = 'scoped memory for tpu_custom_call.1']
    #allocation5 [shape = 'u8[16384]{0}', space=vmem, size = 0x4000, scoped, tag = 'input window, operand 1, single buffered']
    #allocation6 [shape = 's32[1]{0}', space=sflag, size = 0x4, scoped, tag = 'scoped memory for tpu_custom_call.1']
    #allocation7 [shape = 'u8[1024]{0}', space=vmem, size = 0x400, scoped, tag = 'output window, operand 0, single buffered']
    %8 = vsyncpa [#allocation3], 0
    %9 = vsyncpa [#allocation6], 0
    %10 = vsyncpa [#allocation4], 0
    // Predicated region
    $region2: #{tpu_custom_call.1} parent=1 // pred_check
      _
    $region3: #{tpu_custom_call.1} parent=1 // pred_check_branch
      %12 = sbr.rel (0) target = $region5
    $region4: #{tpu_custom_call.1} parent=1 // pred_region
      %s14 = ssub.s32 32, 32
      %15 = vsyncadd [#allocation3], %s14
      %s17 = sshll.u32 [#allocation2], 4
      %s18 = int_to_ptr.vmem [resolvable:$true] %s17
      %20 = dma.hbm_to_vmem [thread:$0]  %s0, 32, %s18, [#allocation3]
    $region5: #{tpu_custom_call.1} parent=1 // pred_fallthru
      _
    // Predicated region
    $region6: #{tpu_custom_call.1} parent=1 // pred_check
      _
    $region7: #{tpu_custom_call.1} parent=1 // pred_check_branch
      %22 = sbr.rel (0) target = $region9
    $region8: #{tpu_custom_call.1} parent=1 // pred_region
      %s24 = ssub.s32 512, 512
      %25 = vsyncadd [#allocation6], %s24
      %s26 = sshll.u32 [#allocation5], 4
      %s27 = int_to_ptr.vmem [resolvable:$true] %s26
      %32 = dma.hbm_to_vmem [thread:$0]  %s1, 512, %s27, [#allocation6], 128, 128, 8
    $region9: #{tpu_custom_call.1} parent=1 // pred_fallthru
      _
    // Predicated region
    $region10: #{tpu_custom_call.1} parent=1 // pred_check
      _
    $region11: #{tpu_custom_call.1} parent=1 // pred_check_branch
      %34 = sbr.rel (0) target = $region13
    $region12: #{tpu_custom_call.1} parent=1 // pred_region
      _
    $region13: #{tpu_custom_call.1} parent=1 // pred_fallthru
      _
    // Predicated region
    $region14: #{tpu_custom_call.1} parent=1 // pred_check
      _
    $region15: #{tpu_custom_call.1} parent=1 // pred_check_branch
      %36 = sbr.rel (0) target = $region17
    $region16: #{tpu_custom_call.1} parent=1 // pred_region
      %37 = dma.done [#allocation3], 32
    $region17: #{tpu_custom_call.1} parent=1 // pred_fallthru
      _
    // Predicated region
    $region18: #{tpu_custom_call.1} parent=1 // pred_check
      _
    $region19: #{tpu_custom_call.1} parent=1 // pred_check_branch
      %39 = sbr.rel (0) target = $region21
    $region20: #{tpu_custom_call.1} parent=1 // pred_region
      %40 = dma.done [#allocation6], 512
    $region21: #{tpu_custom_call.1} parent=1 // pred_fallthru
      _
    %v41 = vld [vmem:[#allocation2] sm:$0x3]
    %v42 = vld [vmem:[#allocation5] sm:$0xff]
    %v43 = vld [vmem:[#allocation5 + $0x8] sm:$0xff]
    %v44 = vld [vmem:[#allocation5 + $0x10] sm:$0xff]
    %v45 = vld [vmem:[#allocation5 + $0x18] sm:$0xff]
    %v46 = vld [vmem:[%s2] sm:$0x1]
    %v48 = vlaneseq
    %v49 = vshrl.u32 %v48, 7
    %v50 = vsub.s32 0, %v49
    %v51 = vrot.slane %v46, %v50
    %vm53 = vcmask 261120
    %v55 = vsel %vm53, %v41, 0
    %57 = vmatprep.subr.mxu0 0.0
    %58 = vmatpush1.msra.mxu0 0.0
    %59 = vmatprep.subr.mxu0 0.0
    %60 = vmatpush1.msra.mxu0 0.0
    %61 = vmatprep.subr.mxu0 0.0
    %62 = vmatpush1.msra.mxu0 0.0
    %63 = vmatprep.subr.mxu0 0.0
    %64 = vmatpush1.msra.mxu0 0.0
    %65 = vmatprep.subr.mxu0 0.0
    %66 = vmatpush1.msra.mxu0 0.0
    %67 = vmatprep.subr.mxu0 0.0
    %68 = vmatpush1.msra.mxu0 0.0
    %69 = vmatprep.subr.mxu0 0.0
    %70 = vmatpush1.msra.mxu0 0.0
    %71 = vmatprep.subr.mxu0 0.0
    %72 = vmatpush1.msra.mxu0 0.0
    %73 = vmatprep.subr.mxu0 0.0
    %74 = vmatpush1.msra.mxu0 0.0
    %75 = vmatprep.subr.mxu0 0.0
    %76 = vmatpush1.msra.mxu0 0.0
    %77 = vmatprep.subr.mxu0 0.0
    %78 = vmatpush1.msra.mxu0 0.0
    %79 = vmatprep.subr.mxu0 0.0
    %80 = vmatpush1.msra.mxu0 0.0
    %81 = vmatprep.subr.mxu0 0.0
    %82 = vmatpush1.msra.mxu0 %v45
    %83 = vmatprep.subr.mxu0 0.0
    %84 = vmatpush1.msra.mxu0 %v44
    %85 = vmatprep.subr.mxu0 0.0
    %86 = vmatpush1.msra.mxu0 %v43
    %87 = vmatprep.subr.mxu0 0.0
    %88 = vmatpush1.msra.mxu0 %v42
    %89 = vmatprep.subr.mxu0 0.0
    %90 = vmatpush2.msra.mxu0 0.0
    %91 = vmatprep.subr.mxu0 0.0
    %92 = vmatpush2.msra.mxu0 0.0
    %93 = vmatprep.subr.mxu0 0.0
    %94 = vmatpush2.msra.mxu0 0.0
    %95 = vmatprep.subr.mxu0 0.0
    %96 = vmatpush2.msra.mxu0 0.0
    %97 = vmatprep.subr.mxu0 0.0
    %98 = vmatpush2.msra.mxu0 0.0
    %99 = vmatprep.subr.mxu0 0.0
    %100 = vmatpush2.msra.mxu0 0.0
    %101 = vmatprep.subr.mxu0 0.0
    %102 = vmatpush2.msra.mxu0 0.0
    %103 = vmatprep.subr.mxu0 0.0
    %104 = vmatpush2.msra.mxu0 0.0
    %105 = vmatprep.subr.mxu0 0.0
    %106 = vmatpush2.msra.mxu0 0.0
    %107 = vmatprep.subr.mxu0 0.0
    %108 = vmatpush2.msra.mxu0 0.0
    %109 = vmatprep.subr.mxu0 0.0
    %110 = vmatpush2.msra.mxu0 0.0
    %111 = vmatprep.subr.mxu0 0.0
    %112 = vmatpush2.msra.mxu0 0.0
    %113 = vmatprep.subr.mxu0 0.0
    %114 = vmatpush2.msra.mxu0 0.0
    %115 = vmatprep.subr.mxu0 0.0
    %116 = vmatpush2.msra.mxu0 0.0
    %117 = vmatprep.subr.mxu0 0.0
    %118 = vmatpush2.msra.mxu0 0.0
    %119 = vmatprep.subr.mxu0 0.0
    %120 = vmatpush2.msra.mxu0 0.0
    %121 = vmatprep.mubr.f32.mxu0 0.0
    %122 = vmatmul.mubr.f32.gmra.mxu0 %v55
    %v123 = vpop.f32.mrf.mxu0
    %v124 = vadd.f32 %v51, %v123
    %v125 = vpop.f32.mrf.mxu0
    %126 = vdwg.mxu0
    %v127 = vtanh.pop %v124
    %vm128 = vcmask 254976
    %129 = vst.msk [vmem:[#allocation7] sm:$0x3] %vm128, %v127
    // Predicated region
    $region22: #{tpu_custom_call.1} parent=1 // pred_check
      _
    $region23: #{tpu_custom_call.1} parent=1 // pred_check_branch
      %131 = sbr.rel (0) target = $region25
    $region24: #{tpu_custom_call.1} parent=1 // pred_region
      %s133 = ssub.s32 32, 32
      %134 = vsyncadd [#allocation4], %s133
      %s136 = sshll.u32 [#allocation7], 4
      %s137 = int_to_ptr.vmem [resolvable:$true] %s136
      %139 = dma.vmem_to_hbm [thread:$0]  %s137, 32, %s3, [#allocation4]
    $region25: #{tpu_custom_call.1} parent=1 // pred_fallthru
      _
    // Predicated region
    $region26: #{tpu_custom_call.1} parent=1 // pred_check
      _
    $region27: #{tpu_custom_call.1} parent=1 // pred_check_branch
      %141 = sbr.rel (0) target = $region29
    $region28: #{tpu_custom_call.1} parent=1 // pred_region
      %142 = dma.done [#allocation4], 32
    $region29: #{tpu_custom_call.1} parent=1 // pred_fallthru
      _
    %143 = vsyncpa [#allocation3], 1
    %144 = vsyncpa [#allocation6], 1
    %145 = vsyncpa [#allocation4], 1

</llo_original>
